<compile_context>
chip_gen: v7x
topology: tpu7x:2x2x1
jax: 0.10.0
libtpu: 0.0.40
codegen_flags: <defaults>
</compile_context>

<pallas_src>
import jax
import jax.numpy as jnp
from jax import lax
from jax.experimental import pallas as pl
from jax.experimental.pallas import tpu as pltpu

EPS = 1e-5

# Sublane packing per element byte-width (f32 -> 8, bf16 -> 16, i8/fp8 -> 32).
_SUBLANE = {4: 8, 2: 16, 1: 32}

# Target size of one input tile's HBM->VMEM DMA.
_TARGET_TILE_BYTES = 4 * 1024 * 1024


def _vmem_budget():
    """Generation-aware (budget for the tiled working set, scoped VMEM limit).

    v7x has 64 MiB VMEM per TensorCore; v5e/v6e have 128 MiB.  Use ~3/8 of
    physical VMEM for the per-step working set and cap the scoped limit at
    ~3/4, so there is always headroom for compiler-internal scratch.
    """
    try:
        cap = int(pltpu.get_tpu_info().vmem_capacity_bytes)
    except Exception:
        cap = 64 * 1024 * 1024  # conservative (v7x per-core) fallback
    budget = min(cap * 3 // 8, 48 * 1024 * 1024)
    limit = min(cap * 3 // 4, 96 * 1024 * 1024)
    return budget, limit


def _layernorm_kernel(x_ref, g_ref, o_ref):
    # x_ref: (tm, D) row tile; g_ref: (1, D) f32 (gamma + 1), grid-resident.
    x = x_ref[...].astype(jnp.float32)
    mean = jnp.mean(x, axis=-1, keepdims=True)
    centered = x - mean
    var = jnp.mean(centered * centered, axis=-1, keepdims=True)
    inv = lax.rsqrt(var + EPS)  # EUP rsqrt: hidden under the mem-bound regime
    o_ref[...] = (centered * inv * g_ref[...]).astype(o_ref.dtype)


def _choose_tm(rows, D, dtype, budget_bytes):
    """Row tile: ~4 MiB input DMAs, bounded by the VMEM working-set budget
    (double-buffered in/out + ~4 f32 full-tile temporaries), >= 4 grid steps
    when possible, sublane-aligned for the input dtype."""
    itemsize = jnp.dtype(dtype).itemsize
    sublane = _SUBLANE.get(itemsize, 8)
    if rows <= sublane:
        return rows  # single full-height block (block dims == array dims)

    tm_bytes = max(_TARGET_TILE_BYTES // max(D * itemsize, 1), 1)
    # Per row: double-buffered input + output tiles plus ~4 live f32 temps.
    per_row_total = D * (4 * itemsize + 4 * 4)
    tm_budget = max(budget_bytes // max(per_row_total, 1), 1)
    tm = min(tm_bytes, tm_budget)
    # Keep the grid >= 4 steps (2 per TensorCore on v7x) for DMA overlap.
    tm = min(tm, pl.cdiv(rows, 4))
    tm = max(sublane, (tm // sublane) * sublane)
    return tm


def layernorm(x, gamma, *, tm=None):
    """x: (..., D); gamma: (D,). Returns LayerNorm(x) * (gamma + 1)."""
    orig_shape = x.shape
    D = orig_shape[-1]
    rows = 1
    for s in orig_shape[:-1]:
        rows *= s

    x2 = x.reshape(rows, D)
    # Precompute (gamma + 1) once in f32; the kernel just multiplies.
    g2 = (gamma.astype(jnp.float32) + 1.0).reshape(1, D)

    budget_bytes, vmem_limit_bytes = _vmem_budget()
    if tm is None:
        tm = _choose_tm(rows, D, x.dtype, budget_bytes)

    itemsize = jnp.dtype(x.dtype).itemsize
    grid = (pl.cdiv(rows, tm),)  # ragged tail handled by Pallas write-masking

    out = pl.pallas_call(
        _layernorm_kernel,
        out_shape=jax.ShapeDtypeStruct((rows, D), x.dtype),
        grid_spec=pltpu.PrefetchScalarGridSpec(
            num_scalar_prefetch=0,
            grid=grid,
            in_specs=[
                pl.BlockSpec((tm, D), lambda i: (i, 0)),
                pl.BlockSpec((1, D), lambda i: (0, 0)),
            ],
            out_specs=pl.BlockSpec((tm, D), lambda i: (i, 0)),
        ),
        compiler_params=pltpu.CompilerParams(
            dimension_semantics=("parallel",),
            vmem_limit_bytes=vmem_limit_bytes,
        ),
        cost_estimate=pl.CostEstimate(
            flops=7 * rows * D,
            transcendentals=rows,
            bytes_accessed=2 * rows * D * itemsize + D * 4,
        ),
    )(x2, g2)

    return out.reshape(orig_shape)


def _reference(x, gamma):
    mean = jnp.mean(x, axis=-1, keepdims=True)
    var = jnp.mean((x - mean) ** 2, axis=-1, keepdims=True)
    return (x - mean) * lax.rsqrt(var + EPS) * (gamma + 1.0)


if __name__ == "__main__":
    key = jax.random.PRNGKey(0)
    B, S, D = 2, 8, 32  # batch, seq, hidden

    x = jax.random.normal(key, (B, S, D), dtype=jnp.float32)
    # Module init: gamma = zeros(dim)  (so output == plain LayerNorm at init)
    gamma = jnp.zeros((D,), dtype=jnp.float32)

    out = layernorm(x, gamma)
    jax.block_until_ready(out)
    assert jnp.allclose(out, _reference(x, gamma), atol=1e-5, rtol=1e-5)

    # Ragged row-count path (rows not a multiple of the row tile): the tail
    # block is write-masked; valid rows must still match the reference.
    x_r = jax.random.normal(jax.random.PRNGKey(1), (2, 9, D), dtype=jnp.float32)
    g_r = 0.1 * jax.random.normal(jax.random.PRNGKey(2), (D,), dtype=jnp.float32)
    out_r = layernorm(x_r, g_r)
    jax.block_until_ready(out_r)
    assert jnp.allclose(out_r, _reference(x_r, g_r), atol=1e-5, rtol=1e-5)

    print("KERNEL_OK")
</pallas_src>

<mosaic_0001>
module attributes {stable_mosaic.version = 11 : i64} {
  func.func @_layernorm_kernel(%arg0: i32, %arg1: memref<8x32xf32, #tpu.memory_space<vmem>>, %arg2: memref<1x32xf32, #tpu.memory_space<vmem>>, %arg3: memref<8x32xf32, #tpu.memory_space<vmem>>) attributes {dimension_semantics = [#tpu.dimension_semantics<parallel>], iteration_bounds = array<i64: 2>, scalar_prefetch = 0 : i64, scratch_operands = 0 : i64, tpu.core_type = #tpu.core_type<tc>, window_params = [{transform_indices = @transform_0, window_bounds = array<i64: 8, 32>}, {pipeline_mode = #tpu.pipeline_mode<synchronous>, transform_indices = @transform_1, window_bounds = array<i64: 1, 32>}, {transform_indices = @transform_2, window_bounds = array<i64: 8, 32>}]} {
    %c0 = arith.constant 0 : index
    %c0_0 = arith.constant 0 : index
    %0 = vector.load %arg1[%c0, %c0_0] : memref<8x32xf32, #tpu.memory_space<vmem>>, vector<8x32xf32>
    %cst = arith.constant dense<0.000000e+00> : vector<8xf32>
    %1 = vector.multi_reduction <add>, %0, %cst [1] : vector<8x32xf32> to vector<8xf32>
    %2 = vector.shape_cast %1 : vector<8xf32> to vector<8x1xf32>
    %cst_1 = arith.constant 3.200000e+01 : f32
    %3 = vector.broadcast %cst_1 : f32 to vector<8x1xf32>
    %4 = arith.divf %2, %3 : vector<8x1xf32>
    %5 = vector.broadcast %4 : vector<8x1xf32> to vector<8x32xf32>
    %6 = arith.subf %0, %5 : vector<8x32xf32>
    %7 = arith.mulf %6, %6 : vector<8x32xf32>
    %cst_2 = arith.constant dense<0.000000e+00> : vector<8xf32>
    %8 = vector.multi_reduction <add>, %7, %cst_2 [1] : vector<8x32xf32> to vector<8xf32>
    %9 = vector.shape_cast %8 : vector<8xf32> to vector<8x1xf32>
    %cst_3 = arith.constant 3.200000e+01 : f32
    %10 = vector.broadcast %cst_3 : f32 to vector<8x1xf32>
    %11 = arith.divf %9, %10 : vector<8x1xf32>
    %cst_4 = arith.constant 9.99999974E-6 : f32
    %12 = vector.broadcast %cst_4 : f32 to vector<8x1xf32>
    %13 = arith.addf %11, %12 : vector<8x1xf32>
    %14 = math.rsqrt %13 : vector<8x1xf32>
    %15 = vector.broadcast %14 : vector<8x1xf32> to vector<8x32xf32>
    %16 = arith.mulf %6, %15 : vector<8x32xf32>
    %c0_5 = arith.constant 0 : index
    %c0_6 = arith.constant 0 : index
    %17 = vector.load %arg2[%c0_5, %c0_6] : memref<1x32xf32, #tpu.memory_space<vmem>>, vector<1x32xf32>
    %18 = vector.broadcast %17 : vector<1x32xf32> to vector<8x32xf32>
    %19 = arith.mulf %16, %18 : vector<8x32xf32>
    %c0_7 = arith.constant 0 : index
    %c0_8 = arith.constant 0 : index
    %20 = vector.load %arg3[%c0_7, %c0_8] : memref<8x32xf32, #tpu.memory_space<vmem>>, vector<8x32xf32>
    tpu.vector_store %arg3[%c0_7, %c0_8], %19 {strides = array<i32>} : memref<8x32xf32, #tpu.memory_space<vmem>>, vector<8x32xf32>,
    return
  }
  func.func @transform_0(%arg0: i32) -> (i32, i32) {
    %c0_i32 = arith.constant 0 : i32
    %c0_i32_0 = arith.constant 0 : i32
    return %arg0, %c0_i32 : i32, i32
  }
  func.func @transform_1(%arg0: i32) -> (i32, i32) {
    %c0_i32 = arith.constant 0 : i32
    %c0_i32_0 = arith.constant 0 : i32
    %c0_i32_1 = arith.constant 0 : i32
    return %c0_i32, %c0_i32_0 : i32, i32
  }
  func.func @transform_2(%arg0: i32) -> (i32, i32) {
    %c0_i32 = arith.constant 0 : i32
    %c0_i32_0 = arith.constant 0 : i32
    return %arg0, %c0_i32 : i32, i32
  }
}

</mosaic_0001>

<llo_original>
// kernel: tpu_custom_call.1
$region0: #{tpu_custom_call.1}
  #allocation0 [shape = 'u32[]', space=smem, size = 0x4, offset = 0x4, fixed_abs, tag = 'smem constant byte address 0x4 - core index']
  #allocation1 [shape = 'u32[144,128]{1,0:T(1,128)}', space=vmem, size = 0x12000, scoped, tag = 'internal scratch']
  %s0 = inlined_call_operand.hbm [shape: f32[16,32], index: 0, kind: input, shape index: {}]
  %s1 = inlined_call_operand.vmem [shape: f32[1,32], index: 1, kind: input, shape index: {}]
  %s2 = inlined_call_operand.hbm [shape: f32[16,32], index: 2, kind: output, shape index: {}]
  %s3 = sld [smem:[#allocation0]]
  $region45: #{tpu_custom_call.1} parent=0
    _
  %s5 = ssub.s32 1, %s3
  %s6 = scalar_select 0, %s5, %s3
  $region1: #{tpu_custom_call.1} parent=0
    #allocation2 [shape = 'u8[8192]{0}', space=vmem, size = 0x2000, scoped, tag = 'input window, operand 0']
    #allocation3 [shape = 's32[2]{0}', space=sflag, size = 0x8, scoped, tag = 'scoped memory for tpu_custom_call.1']
    #allocation4 [shape = 's32[2]{0}', space=sflag, size = 0x8, scoped, tag = 'scoped memory for tpu_custom_call.1']
    #allocation5 [shape = 'u8[8192]{0}', space=vmem, size = 0x2000, scoped, tag = 'output window, operand 0']
    %7 = vsyncpa [#allocation3], 0
    %s8 = scalar_lea.sflag [#allocation3], 1
    %9 = vsyncpa %s8, 0
    %10 = vsyncpa [#allocation4], 0
    %s11 = scalar_lea.sflag [#allocation4], 1
    %12 = vsyncpa %s11, 0
    loop: start=0, step=1, limit=4
    $region2: #{tpu_custom_call.1} parent=1 // loop_pre_header
      _
    $region3: #{tpu_custom_call.1} parent=1 // loop_header
      %s14 = sphi 0, %s18
      %p15 = scmp.ge.s32.totalorder %s14, 4
      %s24 = sphi 0, %s26
      %s27 = sphi 0, %s24
      %s28 = sphi 0, %s27
      %s44 = sphi 0, %s28
      %s48 = sphi 0, %s48
      %s50 = sphi 0, %s48
      %s51 = sphi 0, %s50
      %s65 = sphi 0, %s51
      %s71 = sphi 0, %s73
      %s74 = sphi 0, %s71
      %s75 = sphi 0, %s74
      %s91 = sphi 0, %s75
    $region4: #{tpu_custom_call.1} parent=1 // loop_header_branch
      %17 = sbr.rel (%p15) target = $region8
    $region5: #{tpu_custom_call.1} parent=1 // loop_body
      %s19 = ssub.s32 %s14, 1
      %s20 = ssub.s32 %s14, 2
      %s21 = sadd.s32 %s14, 1
      %s22 = ssub.s32 %s14, %s21
      %p23 = scmp.eq.s32.totalorder %s22, 0
      %s25 = sadd.s32 %s24, 1
      %s26 = scalar_select %p23, %s24, %s25
      %p29 = pneg %p23
      %p30 = scmp.eq.s32.totalorder %s14, 1
      %p31 = por %p29, %p30
      %p32 = scmp.ne.s32.totalorder %s24, %s27
      %p33 = scmp.eq.s32.totalorder %s14, 0
      %p34 = por %p32, %p33
      %p35 = scmp.ne.s32.totalorder %s24, %s27
      %p36 = scmp.eq.s32.totalorder %s19, 1
      %p37 = por %p35, %p36
      %p38 = scmp.ne.s32.totalorder %s27, %s28
      %p39 = scmp.eq.s32.totalorder %s19, 0
      %p40 = por %p38, %p39
      %p41 = scmp.ne.s32.totalorder %s27, %s28
      %p42 = scmp.eq.s32.totalorder %s20, 1
      %p43 = por %p41, %p42
      %p45 = scmp.ne.s32.totalorder %s28, %s44
      %p46 = scmp.eq.s32.totalorder %s20, 0
      %p47 = por %p45, %p46
      %s49 = sadd.s32 %s48, 1
      %p52 = scmp.eq.s32.totalorder %s14, 1
      %p53 = scmp.ne.s32.totalorder %s48, %s50
      %p54 = scmp.eq.s32.totalorder %s14, 0
      %p55 = por %p53, %p54
      %p56 = scmp.ne.s32.totalorder %s48, %s50
      %p57 = scmp.eq.s32.totalorder %s19, 1
      %p58 = por %p56, %p57
      %p59 = scmp.ne.s32.totalorder %s50, %s51
      %p60 = scmp.eq.s32.totalorder %s19, 0
      %p61 = por %p59, %p60
      %p62 = scmp.ne.s32.totalorder %s50, %s51
      %p63 = scmp.eq.s32.totalorder %s20, 1
      %p64 = por %p62, %p63
      %p66 = scmp.ne.s32.totalorder %s51, %s65
      %p67 = scmp.eq.s32.totalorder %s20, 0
      %p68 = por %p66, %p67
      %s69 = ssub.s32 %s14, %s21
      %p70 = scmp.eq.s32.totalorder %s69, 0
      %s72 = sadd.s32 %s71, 1
      %s73 = scalar_select %p70, %s71, %s72
      %p76 = pneg %p70
      %p77 = scmp.eq.s32.totalorder %s14, 1
      %p78 = por %p76, %p77
      %p79 = scmp.ne.s32.totalorder %s71, %s74
      %p80 = scmp.eq.s32.totalorder %s14, 0
      %p81 = por %p79, %p80
      %p82 = scmp.ne.s32.totalorder %s71, %s74
      %p83 = scmp.eq.s32.totalorder %s19, 1
      %p84 = por %p82, %p83
      %p85 = scmp.ne.s32.totalorder %s74, %s75
      %p86 = scmp.eq.s32.totalorder %s19, 0
      %p87 = por %p85, %p86
      %p88 = scmp.ne.s32.totalorder %s74, %s75
      %p89 = scmp.eq.s32.totalorder %s20, 1
      %p90 = por %p88, %p89
      %p92 = scmp.ne.s32.totalorder %s75, %s91
      %p93 = scmp.eq.s32.totalorder %s20, 0
      %p94 = por %p92, %p93
      %p95 = scmp.le.s32.totalorder 1, %s14
      %p96 = scmp.lt.s32.totalorder %s14, 3
      %p97 = pnand %p95, %p96
      %p98 = pneg %p97
      // Predicated region
      $region9: #{tpu_custom_call.1} parent=5 // pred_check
        _
      $region10: #{tpu_custom_call.1} parent=5 // pred_check_branch
        %100 = sbr.rel (%p97) target = $region12
      $region11: #{tpu_custom_call.1} parent=5 // pred_region
        %s101 = ssub.s32 %s14, 1
        // Predicated region
        $region13: #{tpu_custom_call.1} parent=11 // pred_check
          %p102 = pneg %p61
        $region14: #{tpu_custom_call.1} parent=11 // pred_check_branch
          %104 = sbr.rel (%p102) target = $region16
        $region15: #{tpu_custom_call.1} parent=11 // pred_region
          _
        $region16: #{tpu_custom_call.1} parent=11 // pred_fallthru
          _
      $region12: #{tpu_custom_call.1} parent=5 // pred_fallthru
        _
      %p105 = scmp.lt.s32.totalorder %s14, 2
      // Predicated region
      $region17: #{tpu_custom_call.1} parent=5 // pred_check
        %p106 = pneg %p105
      $region18: #{tpu_custom_call.1} parent=5 // pred_check_branch
        %108 = sbr.rel (%p106) target = $region20
      $region19: #{tpu_custom_call.1} parent=5 // pred_region
        // Predicated region
        $region21: #{tpu_custom_call.1} parent=19 // pred_check
          %p109 = pneg %p34
        $region22: #{tpu_custom_call.1} parent=19 // pred_check_branch
          %111 = sbr.rel (%p109) target = $region24
        $region23: #{tpu_custom_call.1} parent=19 // pred_region
          %s112 = sand.u32 %s24, 1
          %s113 = scalar_lea.sflag [#allocation3], %s112
          %s114 = sand.u32 %s24, 1
          %s115 = smul.addr %s114, 8
          %s116 = scalar_lea.vmem [#allocation2], %s115
          %s118 = ssub.s32 128, 128
          %119 = vsyncadd %s113, %s118
          %s120 = smul.addr %s14, 128
          %s121 = scalar_lea.hbm %s0, %s120
          %s123 = sshll.u32 %s116, 4
          %s124 = int_to_ptr.vmem [resolvable:$true] %s123
          %126 = dma.hbm_to_vmem [thread:$0]  %s121, 128, %s124, %s113
        $region24: #{tpu_custom_call.1} parent=19 // pred_fallthru
          _
      $region20: #{tpu_custom_call.1} parent=5 // pred_fallthru
        _
      %p127 = scmp.le.s32.totalorder 1, %s14
      %p128 = scmp.lt.s32.totalorder %s14, 3
      %p129 = pnand %p127, %p128
      %p130 = pneg %p129
      // Predicated region
      $region25: #{tpu_custom_call.1} parent=5 // pred_check
        _
      $region26: #{tpu_custom_call.1} parent=5 // pred_check_branch
        %132 = sbr.rel (%p129) target = $region28
      $region27: #{tpu_custom_call.1} parent=5 // pred_region
        %s133 = ssub.s32 %s14, 1
        %s134 = sand.u32 %s27, 1
        %s135 = scalar_lea.sflag [#allocation3], %s134
        %s136 = sand.u32 %s27, 1
        %s137 = smul.addr %s136, 8
        %s138 = scalar_lea.vmem [#allocation2], %s137
        // Predicated region
        $region29: #{tpu_custom_call.1} parent=27 // pred_check
          %p139 = pneg %p40
        $region30: #{tpu_custom_call.1} parent=27 // pred_check_branch
          %141 = sbr.rel (%p139) target = $region32
        $region31: #{tpu_custom_call.1} parent=27 // pred_region
          %142 = dma.done %s135, 128
        $region32: #{tpu_custom_call.1} parent=27 // pred_fallthru
          _
        %s143 = sand.u32 %s27, 1
        %s144 = scalar_lea.sflag [#allocation3], %s143
        %s145 = sand.u32 %s27, 1
        %s146 = smul.addr %s145, 8
        %s147 = scalar_lea.vmem [#allocation2], %s146
        %p148 = pneg %p40
        %p149 = pneg %p37
        %p150 = pneg %p61
        %p151 = pneg %p58
        %p152 = pneg %p87
        %p153 = pneg %p84
        %s154 = sand.u32 %s74, 1
        %s155 = scalar_lea.sflag [#allocation4], %s154
        %s156 = sand.u32 %s74, 1
        %s157 = smul.addr %s156, 8
        %s158 = scalar_lea.vmem [#allocation5], %s157
        %v159 = vld [vmem:[%s138] sm:$0xff]
        %vm160 = vcmask 261120
        %v161 = vsel %vm160, %v159, 0.0
        %162 = vadd.xlane.f32.xlu0 %v161
        %v163 = vpop.xlane.xlu0 %162
        %v164 = vrcp.pop 32.0
        %v165 = vmul.f32 %v163, %v164
        %v166 = vsub.f32 %v159, %v165
        %v167 = vmul.f32 %v166, %v166
        %v168 = vsel %vm160, %v167, 0.0
        %169 = vadd.xlane.f32.xlu0 %v168
        %v170 = vpop.xlane.xlu0 %169
        %v171 = vmul.f32 %v170, %v164
        %v172 = vadd.f32 %v171, 1e-05
        %v173 = vrsqrt.pop %v172
        %v174 = vmul.f32 %v166, %v173
        %v175 = vld [vmem:[%s1] sm:$0x1]
        %v177 = vlaneseq
        %v178 = vshrl.u32 %v177, 7
        %v179 = vsub.s32 0, %v178
        %v180 = vrot.slane %v175, %v179
        %v182 = vmul.f32 %v174, %v180
        %183 = vst.msk [vmem:[%s158] sm:$0xff] %vm160, %v182
        %s184 = sand.u32 %s74, 1
        %s185 = scalar_lea.sflag [#allocation4], %s184
        %s186 = sand.u32 %s74, 1
        %s187 = smul.addr %s186, 8
        %s188 = scalar_lea.vmem [#allocation5], %s187
        // Predicated region
        $region33: #{tpu_custom_call.1} parent=27 // pred_check
          %p189 = pneg %p84
        $region34: #{tpu_custom_call.1} parent=27 // pred_check_branch
          %191 = sbr.rel (%p189) target = $region36
        $region35: #{tpu_custom_call.1} parent=27 // pred_region
          %s193 = ssub.s32 128, 128
          %194 = vsyncadd %s185, %s193
          %s195 = smul.addr %s19, 128
          %s196 = scalar_lea.hbm %s2, %s195
          %s198 = sshll.u32 %s188, 4
          %s199 = int_to_ptr.vmem [resolvable:$true] %s198
          %201 = dma.vmem_to_hbm [thread:$0]  %s199, 128, %s196, %s185
        $region36: #{tpu_custom_call.1} parent=27 // pred_fallthru
          _
      $region28: #{tpu_custom_call.1} parent=5 // pred_fallthru
        _
      %p202 = scmp.le.s32.totalorder 2, %s14
      // Predicated region
      $region37: #{tpu_custom_call.1} parent=5 // pred_check
        %p203 = pneg %p202
      $region38: #{tpu_custom_call.1} parent=5 // pred_check_branch
        %205 = sbr.rel (%p203) target = $region40
      $region39: #{tpu_custom_call.1} parent=5 // pred_region
        %s206 = ssub.s32 %s14, 2
        // Predicated region
        $region41: #{tpu_custom_call.1} parent=39 // pred_check
          %p207 = pneg %p90
        $region42: #{tpu_custom_call.1} parent=39 // pred_check_branch
          %209 = sbr.rel (%p207) target = $region44
        $region43: #{tpu_custom_call.1} parent=39 // pred_region
          %s210 = sand.u32 %s75, 1
          %s211 = scalar_lea.sflag [#allocation4], %s210
          %s212 = sand.u32 %s75, 1
          %s213 = smul.addr %s212, 8
          %s214 = scalar_lea.vmem [#allocation5], %s213
          %215 = dma.done %s211, 128
        $region44: #{tpu_custom_call.1} parent=39 // pred_fallthru
          _
      $region40: #{tpu_custom_call.1} parent=5 // pred_fallthru
        _
    $region6: #{tpu_custom_call.1} parent=1 // loop_footer
      %s18 = sadd.s32 1, %s14
    $region7: #{tpu_custom_call.1} parent=1 // loop_footer_branch
      %13 = sbr.rel target = $region3
    $region8: #{tpu_custom_call.1} parent=1 // loop_exit
      _
    %216 = vsyncpa [#allocation3], 1
    %s217 = scalar_lea.sflag [#allocation3], 1
    %218 = vsyncpa %s217, 1
    %219 = vsyncpa [#allocation4], 1
    %s220 = scalar_lea.sflag [#allocation4], 1
    %221 = vsyncpa %s220, 1

</llo_original>
